<compile_context>
chip_gen: v5e
topology: v5e:2x2
jax: 0.10.0
libtpu: 0.0.40
codegen_flags: <defaults>
</compile_context>

<pallas_src>
import functools

import jax
import jax.numpy as jnp
from jax.experimental import pallas as pl
from jax.experimental.pallas import tpu as pltpu

_MIB = 1024 * 1024


def _round_up(a, b):
    return ((a + b - 1) // b) * b


def _tpu_vmem_and_cores():
    """(physical VMEM bytes per TC, TensorCores per chip) with safe fallbacks."""
    vmem = None
    cores = None
    try:
        info = pltpu.get_tpu_info()
        for attr in ("vmem_capacity_bytes", "vmem_size_bytes", "vmem_bytes"):
            val = getattr(info, attr, None)
            if val:
                vmem = int(val)
                break
        for attr in ("num_cores", "tensorcores_per_chip", "num_tensorcores"):
            val = getattr(info, attr, None)
            if val:
                cores = int(val)
                break
    except Exception:
        pass
    kind = ""
    try:
        kind = jax.devices()[0].device_kind.lower()
    except Exception:
        pass
    is_v7 = "v7" in kind
    if vmem is None:
        vmem = 64 * _MIB if is_v7 else 128 * _MIB  # v7x: 64 MiB; v5e/v6e: 128 MiB
    if cores is None:
        cores = 2 if is_v7 else 1                  # v7x: 2 TCs; v5e/v6e: 1 TC
    return vmem, cores


def _pick_tile_and_vmem(rows, hidden, in_bytes, out_bytes):
    """Row tile tm and explicit scoped-VMEM limit for the LayerNorm grid."""
    phys, num_cores = _tpu_vmem_and_cores()

    row_in = hidden * in_bytes
    row_out = hidden * out_bytes
    row_f32 = hidden * 4  # f32 block temporaries from the in-kernel astype/math

    # 1) Size by bytes per step: ~4 MiB of input per block amortizes the
    #    ~0.35 us fixed per-step pipeline cost to well under 1%.
    target_block_bytes = 4 * _MIB
    tm = max(8, (target_block_bytes // row_in) // 8 * 8)

    # 2) VMEM cap: double-buffered input + output blocks plus ~2 live f32
    #    temporaries of one block must fit well within half of physical VMEM.
    per_row_vmem = 2 * (row_in + row_out) + 2 * row_f32
    tm_cap = ((phys // 2) // max(per_row_vmem, 1)) // 8 * 8
    tm = min(tm, max(8, tm_cap))

    rows_up = _round_up(max(rows, 1), 8)
    tm = min(tm, rows_up)

    # 3) Pipelining / megacore: prefer >= 4 steps per TensorCore (grid >= 8 on
    #    v7x, >= 3 on single-TC chips) when rows allow, but never shrink a
    #    block below ~1 MiB just to manufacture steps — that would only add
    #    per-step overhead on small inputs.
    min_steps = 4 * num_cores if num_cores >= 2 else 3
    min_block_rows = max(8, (_MIB // row_in) // 8 * 8)
    if rows_up >= min_steps * min_block_rows:
        split_tm = _round_up(pl.cdiv(rows, min_steps), 8)
        tm = min(tm, max(min_block_rows, split_tm))
    tm = max(8, (tm // 8) * 8)

    # 4) Tight scoped-VMEM limit: pipelined I/O buffers + f32 temporaries +
    #    params + a few MiB headroom.  No large floor; leave VMEM for
    #    co-resident fusions (matters most on v7x's 64 MiB budget).
    needed = (2 * tm * row_in + 2 * tm * row_out + 2 * tm * row_f32
              + 2 * row_f32)
    vmem_limit = needed + 4 * _MIB
    vmem_limit = max(vmem_limit, 8 * _MIB)            # Mosaic internal scratch slack
    vmem_limit = int(min(vmem_limit, phys - 8 * _MIB))
    return tm, vmem_limit


def _layernorm_kernel(x_ref, w_ref, b_ref, o_ref, *, eps):
    # x_ref: (tm, H) block; w_ref/b_ref: (1, H) f32, VMEM-resident across the
    # grid (constant index_map); o_ref: (tm, H).
    x = x_ref[...].astype(jnp.float32)
    inv_h = 1.0 / x.shape[-1]                       # fold mean divide to a constant mul
    u = jnp.sum(x, axis=-1, keepdims=True) * inv_h
    xc = x - u
    s = jnp.sum(xc * xc, axis=-1, keepdims=True) * inv_h
    inv = jax.lax.rsqrt(s + eps)                    # EUP rsqrt (free slot)
    y = xc * inv
    o_ref[...] = (w_ref[...] * y + b_ref[...]).astype(o_ref.dtype)


def layer_norm(x, weight, bias, eps=1e-12):
    """LayerNorm over the last axis of x (TF-style: epsilon inside the sqrt)."""
    orig_shape = x.shape
    hidden = orig_shape[-1]
    x2 = x.reshape(-1, hidden)
    rows = x2.shape[0]

    # Pre-cast the affine params once (tiny) instead of per grid step.
    w2 = weight.reshape(1, hidden).astype(jnp.float32)
    b2 = bias.reshape(1, hidden).astype(jnp.float32)

    in_bytes = jnp.dtype(x2.dtype).itemsize
    out_bytes = in_bytes
    tm, vmem_limit = _pick_tile_and_vmem(rows, hidden, in_bytes, out_bytes)

    # No jnp.pad / trailing slice: the ragged tail block computes on
    # unspecified rows (rows are independent) and its out-of-range stores are
    # masked off by Pallas.
    grid = (pl.cdiv(rows, tm),)

    kernel = functools.partial(_layernorm_kernel, eps=eps)

    out = pl.pallas_call(
        kernel,
        out_shape=jax.ShapeDtypeStruct((rows, hidden), x.dtype),
        grid_spec=pltpu.PrefetchScalarGridSpec(
            num_scalar_prefetch=0,
            grid=grid,
            in_specs=[
                pl.BlockSpec((tm, hidden), lambda i: (i, 0)),
                pl.BlockSpec((1, hidden), lambda i: (0, 0)),
                pl.BlockSpec((1, hidden), lambda i: (0, 0)),
            ],
            out_specs=pl.BlockSpec((tm, hidden), lambda i: (i, 0)),
        ),
        compiler_params=pltpu.CompilerParams(
            dimension_semantics=("parallel",),
            vmem_limit_bytes=vmem_limit,
        ),
    )(x2, w2, b2)

    return out.reshape(orig_shape)


def _reference_layer_norm(x, weight, bias, eps=1e-12):
    u = jnp.mean(x, axis=-1, keepdims=True)
    s = jnp.mean((x - u) ** 2, axis=-1, keepdims=True)
    return weight * ((x - u) / jnp.sqrt(s + eps)) + bias


if __name__ == "__main__":
    key = jax.random.PRNGKey(0)
    k1, k2, k3, k4 = jax.random.split(key, 4)

    # Shapes implied by the module: LayerNorm hidden = num_labels *
    # attention_head_size = 6 * 32 = 192 (StarTransformerLayer hidden=192).
    batch, seq, hidden = 2, 8, 192
    eps = 1e-12

    x = jax.random.normal(k1, (batch, seq, hidden), dtype=jnp.float32)
    weight = jnp.ones((hidden,), dtype=jnp.float32)   # nn.Parameter(torch.ones)
    bias = jnp.zeros((hidden,), dtype=jnp.float32)    # nn.Parameter(torch.zeros)

    out = layer_norm(x, weight, bias, eps=eps)
    out = jax.block_until_ready(out)
    ref = _reference_layer_norm(x, weight, bias, eps=eps)
    assert out.shape == x.shape and out.dtype == x.dtype
    assert jnp.allclose(out, ref, atol=1e-5, rtol=1e-5)

    # Second check: ragged row count (rows=21 does not divide the 8-row
    # sublane multiple) with non-trivial affine params, exercising the
    # no-pad tail-masking path.
    x2 = jax.random.normal(k2, (3, 7, hidden), dtype=jnp.float32)
    w2 = 1.0 + 0.1 * jax.random.normal(k3, (hidden,), dtype=jnp.float32)
    b2 = 0.1 * jax.random.normal(k4, (hidden,), dtype=jnp.float32)

    out2 = layer_norm(x2, w2, b2, eps=eps)
    out2 = jax.block_until_ready(out2)
    ref2 = _reference_layer_norm(x2, w2, b2, eps=eps)
    assert out2.shape == x2.shape and out2.dtype == x2.dtype
    assert jnp.allclose(out2, ref2, atol=1e-5, rtol=1e-5)

    print("KERNEL_OK")
</pallas_src>

<mosaic_0001>
module attributes {stable_mosaic.version = 11 : i64} {
  func.func @_layernorm_kernel(%arg0: i32, %arg1: memref<16x192xf32, #tpu.memory_space<vmem>>, %arg2: memref<1x192xf32, #tpu.memory_space<vmem>>, %arg3: memref<1x192xf32, #tpu.memory_space<vmem>>, %arg4: memref<16x192xf32, #tpu.memory_space<vmem>>) attributes {dimension_semantics = [#tpu.dimension_semantics<parallel>], iteration_bounds = array<i64: 1>, scalar_prefetch = 0 : i64, scratch_operands = 0 : i64, tpu.core_type = #tpu.core_type<tc>, window_params = [{transform_indices = @transform_0, window_bounds = array<i64: 16, 192>}, {pipeline_mode = #tpu.pipeline_mode<synchronous>, transform_indices = @transform_1, window_bounds = array<i64: 1, 192>}, {pipeline_mode = #tpu.pipeline_mode<synchronous>, transform_indices = @transform_2, window_bounds = array<i64: 1, 192>}, {transform_indices = @transform_3, window_bounds = array<i64: 16, 192>}]} {
    %c0 = arith.constant 0 : index
    %c0_0 = arith.constant 0 : index
    %0 = vector.load %arg1[%c0, %c0_0] : memref<16x192xf32, #tpu.memory_space<vmem>>, vector<16x192xf32>
    %cst = arith.constant dense<0.000000e+00> : vector<16xf32>
    %1 = vector.multi_reduction <add>, %0, %cst [1] : vector<16x192xf32> to vector<16xf32>
    %2 = vector.shape_cast %1 : vector<16xf32> to vector<16x1xf32>
    %cst_1 = arith.constant 0.00520833349 : f32
    %3 = vector.broadcast %cst_1 : f32 to vector<16x1xf32>
    %4 = arith.mulf %2, %3 : vector<16x1xf32>
    %5 = vector.broadcast %4 : vector<16x1xf32> to vector<16x192xf32>
    %6 = arith.subf %0, %5 : vector<16x192xf32>
    %7 = arith.mulf %6, %6 : vector<16x192xf32>
    %cst_2 = arith.constant dense<0.000000e+00> : vector<16xf32>
    %8 = vector.multi_reduction <add>, %7, %cst_2 [1] : vector<16x192xf32> to vector<16xf32>
    %9 = vector.shape_cast %8 : vector<16xf32> to vector<16x1xf32>
    %cst_3 = arith.constant 0.00520833349 : f32
    %10 = vector.broadcast %cst_3 : f32 to vector<16x1xf32>
    %11 = arith.mulf %9, %10 : vector<16x1xf32>
    %cst_4 = arith.constant 9.99999996E-13 : f32
    %12 = vector.broadcast %cst_4 : f32 to vector<16x1xf32>
    %13 = arith.addf %11, %12 : vector<16x1xf32>
    %14 = math.rsqrt %13 : vector<16x1xf32>
    %15 = vector.broadcast %14 : vector<16x1xf32> to vector<16x192xf32>
    %16 = arith.mulf %6, %15 : vector<16x192xf32>
    %c0_5 = arith.constant 0 : index
    %c0_6 = arith.constant 0 : index
    %17 = vector.load %arg2[%c0_5, %c0_6] : memref<1x192xf32, #tpu.memory_space<vmem>>, vector<1x192xf32>
    %18 = vector.broadcast %17 : vector<1x192xf32> to vector<16x192xf32>
    %19 = arith.mulf %18, %16 : vector<16x192xf32>
    %c0_7 = arith.constant 0 : index
    %c0_8 = arith.constant 0 : index
    %20 = vector.load %arg3[%c0_7, %c0_8] : memref<1x192xf32, #tpu.memory_space<vmem>>, vector<1x192xf32>
    %21 = vector.broadcast %20 : vector<1x192xf32> to vector<16x192xf32>
    %22 = arith.addf %19, %21 : vector<16x192xf32>
    %c0_9 = arith.constant 0 : index
    %c0_10 = arith.constant 0 : index
    %23 = vector.load %arg4[%c0_9, %c0_10] : memref<16x192xf32, #tpu.memory_space<vmem>>, vector<16x192xf32>
    tpu.vector_store %arg4[%c0_9, %c0_10], %22 {strides = array<i32>} : memref<16x192xf32, #tpu.memory_space<vmem>>, vector<16x192xf32>,
    return
  }
  func.func @transform_0(%arg0: i32) -> (i32, i32) {
    %c0_i32 = arith.constant 0 : i32
    %c0_i32_0 = arith.constant 0 : i32
    return %arg0, %c0_i32 : i32, i32
  }
  func.func @transform_1(%arg0: i32) -> (i32, i32) {
    %c0_i32 = arith.constant 0 : i32
    %c0_i32_0 = arith.constant 0 : i32
    %c0_i32_1 = arith.constant 0 : i32
    return %c0_i32, %c0_i32_0 : i32, i32
  }
  func.func @transform_2(%arg0: i32) -> (i32, i32) {
    %c0_i32 = arith.constant 0 : i32
    %c0_i32_0 = arith.constant 0 : i32
    %c0_i32_1 = arith.constant 0 : i32
    return %c0_i32, %c0_i32_0 : i32, i32
  }
  func.func @transform_3(%arg0: i32) -> (i32, i32) {
    %c0_i32 = arith.constant 0 : i32
    %c0_i32_0 = arith.constant 0 : i32
    return %arg0, %c0_i32 : i32, i32
  }
}

</mosaic_0001>

<llo_original>
// kernel: tpu_custom_call.1
$region0: #{tpu_custom_call.1}
  #allocation0 [shape = 'u32[]', space=smem, size = 0x4, offset = 0x4, fixed_abs, tag = 'smem constant byte address 0x4 - core index']
  #allocation1 [shape = 'u32[72,128]{1,0:T(1,128)}', space=vmem, size = 0x9000, scoped, tag = 'internal scratch']
  %s0 = inlined_call_operand.hbm [shape: f32[16,192], index: 0, kind: input, shape index: {}]
  %s1 = inlined_call_operand.hbm [shape: f32[1,192], index: 1, kind: input, shape index: {}]
  %s2 = inlined_call_operand.hbm [shape: f32[1,192], index: 2, kind: input, shape index: {}]
  %s3 = inlined_call_operand.hbm [shape: f32[16,192], index: 3, kind: output, shape index: {}]
  %s4 = sld [smem:[#allocation0]]
  $region34: #{tpu_custom_call.1} parent=0
    _
  %s6 = ssub.s32 1, %s4
  %s7 = scalar_select 0, %s6, %s4
  $region1: #{tpu_custom_call.1} parent=0
    #allocation2 [shape = 'u8[16384]{0}', space=vmem, size = 0x4000, scoped, tag = 'input window, operand 0, single buffered']
    #allocation3 [shape = 's32[1]{0}', space=sflag, size = 0x4, scoped, tag = 'scoped memory for tpu_custom_call.1']
    #allocation4 [shape = 's32[1]{0}', space=sflag, size = 0x4, scoped, tag = 'scoped memory for tpu_custom_call.1']
    #allocation5 [shape = 'u8[1024]{0}', space=vmem, size = 0x400, scoped, tag = 'input window, operand 1, single buffered']
    #allocation6 [shape = 's32[1]{0}', space=sflag, size = 0x4, scoped, tag = 'scoped memory for tpu_custom_call.1']
    #allocation7 [shape = 'u8[1024]{0}', space=vmem, size = 0x400, scoped, tag = 'input window, operand 2, single buffered']
    #allocation8 [shape = 'u8[16384]{0}', space=vmem, size = 0x4000, scoped, tag = 'output window, operand 0, single buffered']
    %8 = vsyncpa [#allocation3], 0
    %9 = vsyncpa [#allocation6], 0
    %10 = vsyncpa [#allocation4], 0
    // Predicated region
    $region2: #{tpu_custom_call.1} parent=1 // pred_check
      _
    $region3: #{tpu_custom_call.1} parent=1 // pred_check_branch
      %12 = sbr.rel (0) target = $region5
    $region4: #{tpu_custom_call.1} parent=1 // pred_region
      %14 = vsyncadd [#allocation3], 0
      %s15 = sshll.u32 %s0, 4
      %s16 = int_to_ptr.hbm [resolvable:$true] %s15
      %s17 = sshll.u32 [#allocation2], 4
      %s18 = int_to_ptr.vmem [resolvable:$true] %s17
      %23 = dma.hbm_to_vmem [thread:$0]  %s16, 512, %s18, [#allocation3], 256, 256, 16
    $region5: #{tpu_custom_call.1} parent=1 // pred_fallthru
      _
    // Predicated region
    $region6: #{tpu_custom_call.1} parent=1 // pred_check
      _
    $region7: #{tpu_custom_call.1} parent=1 // pred_check_branch
      %25 = sbr.rel (0) target = $region9
    $region8: #{tpu_custom_call.1} parent=1 // pred_region
      %27 = vsyncadd [#allocation6], 0
      %s29 = sshll.u32 %s1, 4
      %s30 = int_to_ptr.hbm [resolvable:$true] %s29
      %s31 = sshll.u32 [#allocation5], 4
      %s32 = int_to_ptr.vmem [resolvable:$true] %s31
      %34 = dma.hbm_to_vmem [thread:$0]  %s30, 32, %s32, [#allocation6]
    $region9: #{tpu_custom_call.1} parent=1 // pred_fallthru
      _
    // Predicated region
    $region10: #{tpu_custom_call.1} parent=1 // pred_check
      _
    $region11: #{tpu_custom_call.1} parent=1 // pred_check_branch
      %36 = sbr.rel (0) target = $region13
    $region12: #{tpu_custom_call.1} parent=1 // pred_region
      %38 = vsyncadd [#allocation6], 0
      %s40 = sshll.u32 %s2, 4
      %s41 = int_to_ptr.hbm [resolvable:$true] %s40
      %s42 = sshll.u32 [#allocation7], 4
      %s43 = int_to_ptr.vmem [resolvable:$true] %s42
      %45 = dma.hbm_to_vmem [thread:$0]  %s41, 32, %s43, [#allocation6]
    $region13: #{tpu_custom_call.1} parent=1 // pred_fallthru
      _
    // Predicated region
    $region14: #{tpu_custom_call.1} parent=1 // pred_check
      _
    $region15: #{tpu_custom_call.1} parent=1 // pred_check_branch
      %47 = sbr.rel (0) target = $region17
    $region16: #{tpu_custom_call.1} parent=1 // pred_region
      %49 = dma.done [#allocation3], 512
    $region17: #{tpu_custom_call.1} parent=1 // pred_fallthru
      _
    // Predicated region
    $region18: #{tpu_custom_call.1} parent=1 // pred_check
      _
    $region19: #{tpu_custom_call.1} parent=1 // pred_check_branch
      %51 = sbr.rel (0) target = $region21
    $region20: #{tpu_custom_call.1} parent=1 // pred_region
      %53 = dma.done [#allocation6], 32
    $region21: #{tpu_custom_call.1} parent=1 // pred_fallthru
      _
    // Predicated region
    $region22: #{tpu_custom_call.1} parent=1 // pred_check
      _
    $region23: #{tpu_custom_call.1} parent=1 // pred_check_branch
      %55 = sbr.rel (0) target = $region25
    $region24: #{tpu_custom_call.1} parent=1 // pred_region
      %57 = dma.done [#allocation6], 32
    $region25: #{tpu_custom_call.1} parent=1 // pred_fallthru
      _
    %v58 = vld [vmem:[#allocation2] sm:$0xff]
    %v59 = vld [vmem:[#allocation2 + $0x8] sm:$0xff]
    %v60 = vld [vmem:[#allocation2 + $0x10] sm:$0xff]
    %v61 = vld [vmem:[#allocation2 + $0x18] sm:$0xff]
    %vm62 = vcmask 523264
    %v63 = vsel %vm62, %v59, 0.0
    %v64 = vadd.f32 %v58, %v63
    %65 = vadd.xlane.f32.xlu0 %v64
    %v66 = vpop.xlane.xlu0 %65
    %v67 = vsel %vm62, %v61, 0.0
    %v68 = vadd.f32 %v60, %v67
    %69 = vadd.xlane.f32.xlu0 %v68
    %v70 = vpop.xlane.xlu0 %69
    %v71 = vmul.f32 %v66, 0.0052083335
    %v72 = vmul.f32 %v70, 0.0052083335
    %v73 = vsub.f32 %v58, %v71
    %v74 = vsub.f32 %v59, %v71
    %v75 = vsub.f32 %v60, %v72
    %v76 = vsub.f32 %v61, %v72
    %v77 = vmul.f32 %v73, %v73
    %v78 = vmul.f32 %v74, %v74
    %v79 = vmul.f32 %v75, %v75
    %v80 = vmul.f32 %v76, %v76
    %v81 = vsel %vm62, %v78, 0.0
    %v82 = vadd.f32 %v77, %v81
    %83 = vadd.xlane.f32.xlu0 %v82
    %v84 = vpop.xlane.xlu0 %83
    %v85 = vsel %vm62, %v80, 0.0
    %v86 = vadd.f32 %v79, %v85
    %87 = vadd.xlane.f32.xlu0 %v86
    %v88 = vpop.xlane.xlu0 %87
    %v89 = vmul.f32 %v84, 0.0052083335
    %v90 = vmul.f32 %v88, 0.0052083335
    %v91 = vadd.f32 %v89, 1e-12
    %v92 = vadd.f32 %v90, 1e-12
    %v93 = vrsqrt.pop %v91
    %v94 = vmul.f32 %v93, %v91
    %v95 = vmul.f32 %v94, %v93
    %v96 = vmul.f32 0.5, %v95
    %v97 = vsub.f32 1.5, %v96
    %v98 = vmul.f32 %v93, %v97
    %vm99 = vweird.f32 %v91
    %vm100 = vweird.f32 %v93
    %vm101 = vmor %vm99, %vm100
    %v102 = vsel %vm101, %v93, %v98
    %v103 = vrsqrt.pop %v92
    %v104 = vmul.f32 %v103, %v92
    %v105 = vmul.f32 %v104, %v103
    %v106 = vmul.f32 0.5, %v105
    %v107 = vsub.f32 1.5, %v106
    %v108 = vmul.f32 %v103, %v107
    %vm109 = vweird.f32 %v92
    %vm110 = vweird.f32 %v103
    %vm111 = vmor %vm109, %vm110
    %v112 = vsel %vm111, %v103, %v108
    %v113 = vmul.f32 %v73, %v102
    %v114 = vmul.f32 %v74, %v102
    %v115 = vmul.f32 %v75, %v112
    %v116 = vmul.f32 %v76, %v112
    %v117 = vld [vmem:[#allocation5] sm:$0x3]
    %v119 = vperm.slane %v117, 0
    %v120 = vperm.slane %v117, 1
    %v123 = vmul.f32 %v119, %v113
    %v124 = vmul.f32 %v120, %v114
    %v125 = vmul.f32 %v119, %v115
    %v126 = vmul.f32 %v120, %v116
    %v127 = vld [vmem:[#allocation7] sm:$0x3]
    %v129 = vperm.slane %v127, 0
    %v130 = vperm.slane %v127, 1
    %v133 = vadd.f32 %v123, %v129
    %v134 = vadd.f32 %v124, %v130
    %v135 = vadd.f32 %v125, %v129
    %v136 = vadd.f32 %v126, %v130
    %137 = vst [vmem:[#allocation8] sm:$0xff] %v133
    %138 = vst.msk [vmem:[#allocation8 + $0x8] sm:$0xff] %vm62, %v134
    %139 = vst [vmem:[#allocation8 + $0x10] sm:$0xff] %v135
    %140 = vst.msk [vmem:[#allocation8 + $0x18] sm:$0xff] %vm62, %v136
    // Predicated region
    $region26: #{tpu_custom_call.1} parent=1 // pred_check
      _
    $region27: #{tpu_custom_call.1} parent=1 // pred_check_branch
      %142 = sbr.rel (0) target = $region29
    $region28: #{tpu_custom_call.1} parent=1 // pred_region
      %144 = vsyncadd [#allocation4], 0
      %s145 = sshll.u32 [#allocation8], 4
      %s146 = int_to_ptr.vmem [resolvable:$true] %s145
      %s147 = sshll.u32 %s3, 4
      %s148 = int_to_ptr.hbm [resolvable:$true] %s147
      %153 = dma.vmem_to_hbm [thread:$0]  %s146, 512, %s148, [#allocation4], 256, 256, 16
    $region29: #{tpu_custom_call.1} parent=1 // pred_fallthru
      _
    // Predicated region
    $region30: #{tpu_custom_call.1} parent=1 // pred_check
      _
    $region31: #{tpu_custom_call.1} parent=1 // pred_check_branch
      %155 = sbr.rel (0) target = $region33
    $region32: #{tpu_custom_call.1} parent=1 // pred_region
      %157 = dma.done [#allocation4], 512
    $region33: #{tpu_custom_call.1} parent=1 // pred_fallthru
      _
    %158 = vsyncpa [#allocation3], 1
    %159 = vsyncpa [#allocation6], 1
    %160 = vsyncpa [#allocation4], 1

</llo_original>
